<compile_context>
chip_gen: v7x
topology: tpu7x:2x2x1
jax: 0.10.0
libtpu: 0.0.40
codegen_flags: <defaults>
</compile_context>

<pallas_src>
import functools

import jax
import jax.numpy as jnp
from jax.experimental import pallas as pl
from jax.experimental.pallas import tpu as pltpu

_LANE = 128
_SUBLANE = 8
_MIN_SPLIT_ROWS = 128  # split into >=2 tiles (v7x dual TensorCore) once B >= 2*this


def _mlp_kernel(x_ref, w1_ref, b1_ref, w2_ref, b2_ref, w3_ref, b3_ref, o_ref):
    # One batch tile per grid step; three MXU matmuls + VPU bias/ReLU fused.
    x = x_ref[...]
    h1 = jnp.dot(x, w1_ref[...], preferred_element_type=jnp.float32) + b1_ref[...]
    h1 = jnp.maximum(h1, 0.0)
    h2 = jnp.dot(h1, w2_ref[...], preferred_element_type=jnp.float32) + b2_ref[...]
    h2 = jnp.maximum(h2, 0.0)
    out = jnp.dot(h2, w3_ref[...], preferred_element_type=jnp.float32) + b3_ref[...]
    o_ref[...] = out.astype(o_ref.dtype)


def _round_up(n, m):
    return ((n + m - 1) // m) * m


def _pick_batch_tile(B, batch_tile):
    if B > batch_tile:
        return batch_tile
    if B >= 2 * _MIN_SPLIT_ROWS:
        # Medium batch: make >=2 tiles so both v7x TensorCores get a share.
        return _round_up(-(-B // 2), _SUBLANE)
    # Small batch: one sublane-aligned tile; ragged rows masked on store.
    return max(_SUBLANE, _round_up(B, _SUBLANE))


def _forward_impl(x, w1p, b1p, w2p, b2p, w3p, b3p, *, out_size, batch_tile):
    B, in_size = x.shape
    Hp = w1p.shape[1]
    Op = w3p.shape[1]

    tb = _pick_batch_tile(B, batch_tile)
    grid = (pl.cdiv(B, tb),)  # ragged last tile handled by Pallas masking

    def resident(shape):
        # Weights/biases: same block every grid step -> single buffer is enough.
        return pl.BlockSpec(shape, lambda i: (0, 0), pipeline_mode=pl.Buffered(1))

    weight_bytes = 4 * (w1p.size + b1p.size + w2p.size + b2p.size + w3p.size + b3p.size)
    bytes_accessed = 4 * B * in_size + 4 * B * Op + weight_bytes
    flops = 2 * B * (in_size * Hp + Hp * Hp + Hp * Op)

    out = pl.pallas_call(
        _mlp_kernel,
        out_shape=jax.ShapeDtypeStruct((B, Op), jnp.float32),
        grid=grid,
        in_specs=[
            pl.BlockSpec((tb, in_size), lambda i: (i, 0)),   # x tile walks batch
            resident(w1p.shape), resident(b1p.shape),
            resident(w2p.shape), resident(b2p.shape),
            resident(w3p.shape), resident(b3p.shape),
        ],
        out_specs=pl.BlockSpec((tb, Op), lambda i: (i, 0)),
        compiler_params=pltpu.CompilerParams(
            dimension_semantics=("parallel",),   # megacore-shardable on v7x
            vmem_limit_bytes=32 << 20,           # ~11 MiB live at tb=512 incl. buffers
        ),
        cost_estimate=pl.CostEstimate(
            flops=flops, transcendentals=0, bytes_accessed=bytes_accessed),
    )(x, w1p, b1p, w2p, b2p, w3p, b3p)

    return out[:, :out_size]


def make_classify_net_forward(params, *, batch_tile=512):
    """Pad the narrow feature dims ONCE and return a jitted forward(x).

    params: dict of w1,b1,w2,b2,w3,b3 with W stored as (in_features, out_features).
    """
    w1, b1 = params["w1"], params["b1"]
    w2, b2 = params["w2"], params["b2"]
    w3, b3 = params["w3"], params["b3"]
    hidden = w1.shape[1]
    out_size = w3.shape[1]

    # Lane-dense padding of the narrow feature dims (exact, zeros only).
    Hp = _round_up(hidden, _LANE)
    Op = _round_up(out_size, _LANE)
    w1p = jnp.pad(w1, ((0, 0), (0, Hp - hidden)))
    b1p = jnp.pad(b1, ((0, 0), (0, Hp - hidden)))
    w2p = jnp.pad(w2, ((0, Hp - hidden), (0, Hp - hidden)))
    b2p = jnp.pad(b2, ((0, 0), (0, Hp - hidden)))
    w3p = jnp.pad(w3, ((0, Hp - hidden), (0, Op - out_size)))
    b3p = jnp.pad(b3, ((0, 0), (0, Op - out_size)))

    fwd = jax.jit(functools.partial(_forward_impl, out_size=out_size,
                                    batch_tile=batch_tile))

    def forward(x):
        return fwd(x, w1p, b1p, w2p, b2p, w3p, b3p)

    return forward


def init_params(key, input_size=2048, hidden=25, output_size=10):
    """Deterministic synthetic parameters, same shapes as the PyTorch module."""
    ks = jax.random.split(key, 6)

    def lin(kw, kb, fan_in, fan_out):
        # PyTorch nn.Linear default init: U(-1/sqrt(fan_in), 1/sqrt(fan_in))
        bound = 1.0 / jnp.sqrt(fan_in)
        w = jax.random.uniform(kw, (fan_in, fan_out), jnp.float32, -bound, bound)
        b = jax.random.uniform(kb, (1, fan_out), jnp.float32, -bound, bound)
        return w, b

    w1, b1 = lin(ks[0], ks[1], input_size, hidden)
    w2, b2 = lin(ks[2], ks[3], hidden, hidden)
    w3, b3 = lin(ks[4], ks[5], hidden, output_size)
    return {"w1": w1, "b1": b1, "w2": w2, "b2": b2, "w3": w3, "b3": b3}


def reference_forward(x, p):
    h1 = jnp.maximum(x @ p["w1"] + p["b1"], 0.0)
    h2 = jnp.maximum(h1 @ p["w2"] + p["b2"], 0.0)
    return h2 @ p["w3"] + p["b3"]


if __name__ == "__main__":
    key = jax.random.PRNGKey(0)
    k_x, k_x2, k_p = jax.random.split(key, 3)

    input_size = 2048
    hidden = 25
    output_size = 10
    params = init_params(k_p, input_size=input_size, hidden=hidden,
                         output_size=output_size)
    forward = make_classify_net_forward(params)

    # Small batch: single (oversized, masked) tile, grid of 1.
    x_small = jax.random.normal(k_x, (4, input_size), jnp.float32)
    out_small = jax.block_until_ready(forward(x_small))
    ref_small = reference_forward(x_small, params)
    assert out_small.shape == (4, output_size), out_small.shape
    assert jnp.allclose(out_small, ref_small, atol=1e-4, rtol=1e-4), "small-batch mismatch"

    # Non-multiple batch: exercises the multi-tile parallel grid + ragged last tile
    # (260 -> 2 tiles of 136, second tile masked to 124 rows, no x pad copy).
    x_big = jax.random.normal(k_x2, (260, input_size), jnp.float32)
    out_big = jax.block_until_ready(forward(x_big))
    ref_big = reference_forward(x_big, params)
    assert out_big.shape == (260, output_size), out_big.shape
    assert jnp.allclose(out_big, ref_big, atol=1e-4, rtol=1e-4), "big-batch mismatch"

    print("KERNEL_OK")
</pallas_src>

<mosaic_0001>
module attributes {stable_mosaic.version = 11 : i64} {
  func.func @_mlp_kernel(%arg0: i32, %arg1: memref<8x2048xf32, #tpu.memory_space<vmem>>, %arg2: memref<2048x128xf32, #tpu.memory_space<vmem>>, %arg3: memref<1x128xf32, #tpu.memory_space<vmem>>, %arg4: memref<128x128xf32, #tpu.memory_space<vmem>>, %arg5: memref<1x128xf32, #tpu.memory_space<vmem>>, %arg6: memref<128x128xf32, #tpu.memory_space<vmem>>, %arg7: memref<1x128xf32, #tpu.memory_space<vmem>>, %arg8: memref<8x128xf32, #tpu.memory_space<vmem>>) attributes {dimension_semantics = [#tpu.dimension_semantics<parallel>], iteration_bounds = array<i64: 1>, scalar_prefetch = 0 : i64, scratch_operands = 0 : i64, tpu.core_type = #tpu.core_type<tc>, window_params = [{transform_indices = @transform_0, window_bounds = array<i64: 8, 2048>}, {pipeline_mode = #tpu.pipeline_mode<synchronous>, transform_indices = @transform_1, window_bounds = array<i64: 2048, 128>}, {pipeline_mode = #tpu.pipeline_mode<synchronous>, transform_indices = @transform_2, window_bounds = array<i64: 1, 128>}, {pipeline_mode = #tpu.pipeline_mode<synchronous>, transform_indices = @transform_3, window_bounds = array<i64: 128, 128>}, {pipeline_mode = #tpu.pipeline_mode<synchronous>, transform_indices = @transform_4, window_bounds = array<i64: 1, 128>}, {pipeline_mode = #tpu.pipeline_mode<synchronous>, transform_indices = @transform_5, window_bounds = array<i64: 128, 128>}, {pipeline_mode = #tpu.pipeline_mode<synchronous>, transform_indices = @transform_6, window_bounds = array<i64: 1, 128>}, {transform_indices = @transform_7, window_bounds = array<i64: 8, 128>}]} {
    %c0 = arith.constant 0 : index
    %c0_0 = arith.constant 0 : index
    %0 = vector.load %arg1[%c0, %c0_0] : memref<8x2048xf32, #tpu.memory_space<vmem>>, vector<8x2048xf32>
    %c0_1 = arith.constant 0 : index
    %c0_2 = arith.constant 0 : index
    %1 = vector.load %arg2[%c0_1, %c0_2] : memref<2048x128xf32, #tpu.memory_space<vmem>>, vector<2048x128xf32>
    %cst = arith.constant dense<0.000000e+00> : vector<8x128xf32>
    %2 = tpu.matmul %0, %1, %cst {dimension_numbers = #tpu.dot_dimension_numbers<[1], [0], [0], [1], [0, 0, 1, 1], [], []>} : vector<8x2048xf32>, vector<2048x128xf32>, vector<8x128xf32> -> vector<8x128xf32>
    %c0_3 = arith.constant 0 : index
    %c0_4 = arith.constant 0 : index
    %3 = vector.load %arg3[%c0_3, %c0_4] : memref<1x128xf32, #tpu.memory_space<vmem>>, vector<1x128xf32>
    %4 = vector.broadcast %3 : vector<1x128xf32> to vector<8x128xf32>
    %5 = arith.addf %2, %4 : vector<8x128xf32>
    %cst_5 = arith.constant 0.000000e+00 : f32
    %6 = vector.broadcast %cst_5 : f32 to vector<8x128xf32>
    %7 = arith.maximumf %5, %6 : vector<8x128xf32>
    %c0_6 = arith.constant 0 : index
    %c0_7 = arith.constant 0 : index
    %8 = vector.load %arg4[%c0_6, %c0_7] : memref<128x128xf32, #tpu.memory_space<vmem>>, vector<128x128xf32>
    %cst_8 = arith.constant dense<0.000000e+00> : vector<8x128xf32>
    %9 = tpu.matmul %7, %8, %cst_8 {dimension_numbers = #tpu.dot_dimension_numbers<[1], [0], [0], [1], [0, 0, 1, 1], [], []>} : vector<8x128xf32>, vector<128x128xf32>, vector<8x128xf32> -> vector<8x128xf32>
    %c0_9 = arith.constant 0 : index
    %c0_10 = arith.constant 0 : index
    %10 = vector.load %arg5[%c0_9, %c0_10] : memref<1x128xf32, #tpu.memory_space<vmem>>, vector<1x128xf32>
    %11 = vector.broadcast %10 : vector<1x128xf32> to vector<8x128xf32>
    %12 = arith.addf %9, %11 : vector<8x128xf32>
    %cst_11 = arith.constant 0.000000e+00 : f32
    %13 = vector.broadcast %cst_11 : f32 to vector<8x128xf32>
    %14 = arith.maximumf %12, %13 : vector<8x128xf32>
    %c0_12 = arith.constant 0 : index
    %c0_13 = arith.constant 0 : index
    %15 = vector.load %arg6[%c0_12, %c0_13] : memref<128x128xf32, #tpu.memory_space<vmem>>, vector<128x128xf32>
    %cst_14 = arith.constant dense<0.000000e+00> : vector<8x128xf32>
    %16 = tpu.matmul %14, %15, %cst_14 {dimension_numbers = #tpu.dot_dimension_numbers<[1], [0], [0], [1], [0, 0, 1, 1], [], []>} : vector<8x128xf32>, vector<128x128xf32>, vector<8x128xf32> -> vector<8x128xf32>
    %c0_15 = arith.constant 0 : index
    %c0_16 = arith.constant 0 : index
    %17 = vector.load %arg7[%c0_15, %c0_16] : memref<1x128xf32, #tpu.memory_space<vmem>>, vector<1x128xf32>
    %18 = vector.broadcast %17 : vector<1x128xf32> to vector<8x128xf32>
    %19 = arith.addf %16, %18 : vector<8x128xf32>
    %c0_17 = arith.constant 0 : index
    %c0_18 = arith.constant 0 : index
    %20 = vector.load %arg8[%c0_17, %c0_18] : memref<8x128xf32, #tpu.memory_space<vmem>>, vector<8x128xf32>
    tpu.vector_store %arg8[%c0_17, %c0_18], %19 {strides = array<i32>} : memref<8x128xf32, #tpu.memory_space<vmem>>, vector<8x128xf32>,
    return
  }
  func.func @transform_0(%arg0: i32) -> (i32, i32) {
    %c0_i32 = arith.constant 0 : i32
    %c0_i32_0 = arith.constant 0 : i32
    return %arg0, %c0_i32 : i32, i32
  }
  func.func @transform_1(%arg0: i32) -> (i32, i32) {
    %c0_i32 = arith.constant 0 : i32
    %c0_i32_0 = arith.constant 0 : i32
    %c0_i32_1 = arith.constant 0 : i32
    return %c0_i32, %c0_i32_0 : i32, i32
  }
  func.func @transform_2(%arg0: i32) -> (i32, i32) {
    %c0_i32 = arith.constant 0 : i32
    %c0_i32_0 = arith.constant 0 : i32
    %c0_i32_1 = arith.constant 0 : i32
    return %c0_i32, %c0_i32_0 : i32, i32
  }
  func.func @transform_3(%arg0: i32) -> (i32, i32) {
    %c0_i32 = arith.constant 0 : i32
    %c0_i32_0 = arith.constant 0 : i32
    %c0_i32_1 = arith.constant 0 : i32
    return %c0_i32, %c0_i32_0 : i32, i32
  }
  func.func @transform_4(%arg0: i32) -> (i32, i32) {
    %c0_i32 = arith.constant 0 : i32
    %c0_i32_0 = arith.constant 0 : i32
    %c0_i32_1 = arith.constant 0 : i32
    return %c0_i32, %c0_i32_0 : i32, i32
  }
  func.func @transform_5(%arg0: i32) -> (i32, i32) {
    %c0_i32 = arith.constant 0 : i32
    %c0_i32_0 = arith.constant 0 : i32
    %c0_i32_1 = arith.constant 0 : i32
    return %c0_i32, %c0_i32_0 : i32, i32
  }
  func.func @transform_6(%arg0: i32) -> (i32, i32) {
    %c0_i32 = arith.constant 0 : i32
    %c0_i32_0 = arith.constant 0 : i32
    %c0_i32_1 = arith.constant 0 : i32
    return %c0_i32, %c0_i32_0 : i32, i32
  }
  func.func @transform_7(%arg0: i32) -> (i32, i32) {
    %c0_i32 = arith.constant 0 : i32
    %c0_i32_0 = arith.constant 0 : i32
    return %arg0, %c0_i32 : i32, i32
  }
}

</mosaic_0001>

<llo_original>
// kernel: _forward_impl.1
$region0: #{_forward_impl.1}
  #allocation0 [shape = 'u32[]', space=smem, size = 0x4, offset = 0x4, fixed_abs, tag = 'smem constant byte address 0x4 - core index']
  #allocation1 [shape = 'u32[144,128]{1,0:T(1,128)}', space=vmem, size = 0x12000, scoped, tag = 'internal scratch']
  %s0 = inlined_call_operand.hbm [shape: f32[4,2048], index: 0, kind: input, shape index: {}]
  %s1 = inlined_call_operand.hbm [shape: f32[2048,128], index: 1, kind: input, shape index: {}]
  %s2 = inlined_call_operand.vmem [shape: f32[1,128], index: 2, kind: input, shape index: {}]
  %s3 = inlined_call_operand.hbm [shape: f32[128,128], index: 3, kind: input, shape index: {}]
  %s4 = inlined_call_operand.vmem [shape: f32[1,128], index: 4, kind: input, shape index: {}]
  %s5 = inlined_call_operand.hbm [shape: f32[128,128], index: 5, kind: input, shape index: {}]
  %s6 = inlined_call_operand.vmem [shape: f32[1,128], index: 6, kind: input, shape index: {}]
  %s7 = inlined_call_operand.hbm [shape: f32[4,128], index: 7, kind: output, shape index: {}]
  %s8 = sld [smem:[#allocation0]]
  $region54: #{_forward_impl.1} parent=0
    _
  %s10 = ssub.s32 1, %s8
  %s11 = scalar_select 0, %s10, %s8
  $region1: #{_forward_impl.1} parent=0
    #allocation2 [shape = 'u8[65536]{0}', space=vmem, size = 0x10000, scoped, tag = 'input window, operand 0, single buffered']
    #allocation3 [shape = 's32[1]{0}', space=sflag, size = 0x4, scoped, tag = 'scoped memory for _forward_impl.1']
    #allocation4 [shape = 's32[1]{0}', space=sflag, size = 0x4, scoped, tag = 'scoped memory for _forward_impl.1']
    #allocation5 [shape = 'u8[1048576]{0}', space=vmem, size = 0x100000, scoped, tag = 'input window, operand 1, single buffered']
    #allocation6 [shape = 's32[1]{0}', space=sflag, size = 0x4, scoped, tag = 'scoped memory for _forward_impl.1']
    #allocation7 [shape = 'u8[65536]{0}', space=vmem, size = 0x10000, scoped, tag = 'input window, operand 3, single buffered']
    #allocation8 [shape = 'u8[65536]{0}', space=vmem, size = 0x10000, scoped, tag = 'input window, operand 5, single buffered']
    #allocation9 [shape = 's32[1]{0}', space=sflag, size = 0x4, scoped, tag = 'scoped memory for _forward_impl.1']
    #allocation10 [shape = 'u8[4096]{0}', space=vmem, size = 0x1000, scoped, tag = 'output window, operand 0, single buffered']
    %12 = vsyncpa [#allocation3], 0
    %13 = vsyncpa [#allocation6], 0
    %14 = vsyncpa [#allocation9], 0
    %15 = vsyncpa [#allocation4], 0
    // Predicated region
    $region2: #{_forward_impl.1} parent=1 // pred_check
      _
    $region3: #{_forward_impl.1} parent=1 // pred_check_branch
      %17 = sbr.rel (0) target = $region5
    $region4: #{_forward_impl.1} parent=1 // pred_region
      %s19 = ssub.s32 2048, 1024
      %20 = vsyncadd [#allocation3], %s19
      %s21 = sshll.u32 [#allocation2], 4
      %s22 = int_to_ptr.vmem [resolvable:$true] %s21
      %27 = dma.hbm_to_vmem [thread:$0]  %s0, 1024, %s22, [#allocation3], 1024, 1024, 64
    $region5: #{_forward_impl.1} parent=1 // pred_fallthru
      _
    // Predicated region
    $region6: #{_forward_impl.1} parent=1 // pred_check
      _
    $region7: #{_forward_impl.1} parent=1 // pred_check_branch
      %29 = sbr.rel (0) target = $region9
    $region8: #{_forward_impl.1} parent=1 // pred_region
      %s31 = ssub.s32 32768, 32768
      %32 = vsyncadd [#allocation6], %s31
      %s33 = sshll.u32 [#allocation5], 4
      %s34 = int_to_ptr.vmem [resolvable:$true] %s33
      %39 = dma.hbm_to_vmem [thread:$0]  %s1, 32768, %s34, [#allocation6], 128, 128, 8
    $region9: #{_forward_impl.1} parent=1 // pred_fallthru
      _
    // Predicated region
    $region10: #{_forward_impl.1} parent=1 // pred_check
      _
    $region11: #{_forward_impl.1} parent=1 // pred_check_branch
      %41 = sbr.rel (0) target = $region13
    $region12: #{_forward_impl.1} parent=1 // pred_region
      _
    $region13: #{_forward_impl.1} parent=1 // pred_fallthru
      _
    // Predicated region
    $region14: #{_forward_impl.1} parent=1 // pred_check
      _
    $region15: #{_forward_impl.1} parent=1 // pred_check_branch
      %43 = sbr.rel (0) target = $region17
    $region16: #{_forward_impl.1} parent=1 // pred_region
      %s45 = ssub.s32 2048, 2048
      %46 = vsyncadd [#allocation6], %s45
      %s47 = sshll.u32 [#allocation7], 4
      %s48 = int_to_ptr.vmem [resolvable:$true] %s47
      %53 = dma.hbm_to_vmem [thread:$0]  %s3, 2048, %s48, [#allocation6], 128, 128, 8
    $region17: #{_forward_impl.1} parent=1 // pred_fallthru
      _
    // Predicated region
    $region18: #{_forward_impl.1} parent=1 // pred_check
      _
    $region19: #{_forward_impl.1} parent=1 // pred_check_branch
      %55 = sbr.rel (0) target = $region21
    $region20: #{_forward_impl.1} parent=1 // pred_region
      _
    $region21: #{_forward_impl.1} parent=1 // pred_fallthru
      _
    // Predicated region
    $region22: #{_forward_impl.1} parent=1 // pred_check
      _
    $region23: #{_forward_impl.1} parent=1 // pred_check_branch
      %57 = sbr.rel (0) target = $region25
    $region24: #{_forward_impl.1} parent=1 // pred_region
      %s59 = ssub.s32 2048, 2048
      %60 = vsyncadd [#allocation9], %s59
      %s61 = sshll.u32 [#allocation8], 4
      %s62 = int_to_ptr.vmem [resolvable:$true] %s61
      %67 = dma.hbm_to_vmem [thread:$0]  %s5, 2048, %s62, [#allocation9], 128, 128, 8
    $region25: #{_forward_impl.1} parent=1 // pred_fallthru
      _
    // Predicated region
    $region26: #{_forward_impl.1} parent=1 // pred_check
      _
    $region27: #{_forward_impl.1} parent=1 // pred_check_branch
      %69 = sbr.rel (0) target = $region29
    $region28: #{_forward_impl.1} parent=1 // pred_region
      _
    $region29: #{_forward_impl.1} parent=1 // pred_fallthru
      _
    // Predicated region
    $region30: #{_forward_impl.1} parent=1 // pred_check
      _
    $region31: #{_forward_impl.1} parent=1 // pred_check_branch
      %71 = sbr.rel (0) target = $region33
    $region32: #{_forward_impl.1} parent=1 // pred_region
      %72 = dma.done [#allocation3], 2048
    $region33: #{_forward_impl.1} parent=1 // pred_fallthru
      _
    // Predicated region
    $region34: #{_forward_impl.1} parent=1 // pred_check
      _
    $region35: #{_forward_impl.1} parent=1 // pred_check_branch
      %74 = sbr.rel (0) target = $region37
    $region36: #{_forward_impl.1} parent=1 // pred_region
      %75 = dma.done [#allocation6], 32768
    $region37: #{_forward_impl.1} parent=1 // pred_fallthru
      _
    // Predicated region
    $region38: #{_forward_impl.1} parent=1 // pred_check
      _
    $region39: #{_forward_impl.1} parent=1 // pred_check_branch
      %77 = sbr.rel (0) target = $region41
    $region40: #{_forward_impl.1} parent=1 // pred_region
      %78 = dma.done [#allocation6], 2048
    $region41: #{_forward_impl.1} parent=1 // pred_fallthru
      _
    // Predicated region
    $region42: #{_forward_impl.1} parent=1 // pred_check
      _
    $region43: #{_forward_impl.1} parent=1 // pred_check_branch
      %80 = sbr.rel (0) target = $region45
    $region44: #{_forward_impl.1} parent=1 // pred_region
      %81 = dma.done [#allocation9], 2048
    $region45: #{_forward_impl.1} parent=1 // pred_fallthru
      _
    %v82 = vld [vmem:[#allocation2] sm:$0xff]
    %v83 = vld [vmem:[#allocation2 + $0x8] sm:$0xff]
    %v84 = vld [vmem:[#allocation2 + $0x10] sm:$0xff]
    %v85 = vld [vmem:[#allocation2 + $0x18] sm:$0xff]
    %v86 = vld [vmem:[#allocation2 + $0x20] sm:$0xff]
    %v87 = vld [vmem:[#allocation2 + $0x28] sm:$0xff]
    %v88 = vld [vmem:[#allocation2 + $0x30] sm:$0xff]
    %v89 = vld [vmem:[#allocation2 + $0x38] sm:$0xff]
    %v90 = vld [vmem:[#allocation2 + $0x40] sm:$0xff]
    %v91 = vld [vmem:[#allocation2 + $0x48] sm:$0xff]
    %v92 = vld [vmem:[#allocation2 + $0x50] sm:$0xff]
    %v93 = vld [vmem:[#allocation2 + $0x58] sm:$0xff]
    %v94 = vld [vmem:[#allocation2 + $0x60] sm:$0xff]
    %v95 = vld [vmem:[#allocation2 + $0x68] sm:$0xff]
    %v96 = vld [vmem:[#allocation2 + $0x70] sm:$0xff]
    %v97 = vld [vmem:[#allocation2 + $0x78] sm:$0xff]
    %v98 = vld [vmem:[#allocation5] sm:$0xff]
    %v99 = vld [vmem:[#allocation5 + $0x8] sm:$0xff]
    %v100 = vld [vmem:[#allocation5 + $0x10] sm:$0xff]
    %v101 = vld [vmem:[#allocation5 + $0x18] sm:$0xff]
    %v102 = vld [vmem:[#allocation5 + $0x20] sm:$0xff]
    %v103 = vld [vmem:[#allocation5 + $0x28] sm:$0xff]
    %v104 = vld [vmem:[#allocation5 + $0x30] sm:$0xff]
    %v105 = vld [vmem:[#allocation5 + $0x38] sm:$0xff]
    %v106 = vld [vmem:[#allocation5 + $0x40] sm:$0xff]
    %v107 = vld [vmem:[#allocation5 + $0x48] sm:$0xff]
    %v108 = vld [vmem:[#allocation5 + $0x50] sm:$0xff]
    %v109 = vld [vmem:[#allocation5 + $0x58] sm:$0xff]
    %v110 = vld [vmem:[#allocation5 + $0x60] sm:$0xff]
    %v111 = vld [vmem:[#allocation5 + $0x68] sm:$0xff]
    %v112 = vld [vmem:[#allocation5 + $0x70] sm:$0xff]
    %v113 = vld [vmem:[#allocation5 + $0x78] sm:$0xff]
    %v114 = vld [vmem:[#allocation5 + $0x80] sm:$0xff]
    %v115 = vld [vmem:[#allocation5 + $0x88] sm:$0xff]
    %v116 = vld [vmem:[#allocation5 + $0x90] sm:$0xff]
    %v117 = vld [vmem:[#allocation5 + $0x98] sm:$0xff]
    %v118 = vld [vmem:[#allocation5 + $0xa0] sm:$0xff]
    %v119 = vld [vmem:[#allocation5 + $0xa8] sm:$0xff]
    %v120 = vld [vmem:[#allocation5 + $0xb0] sm:$0xff]
    %v121 = vld [vmem:[#allocation5 + $0xb8] sm:$0xff]
    %v122 = vld [vmem:[#allocation5 + $0xc0] sm:$0xff]
    %v123 = vld [vmem:[#allocation5 + $0xc8] sm:$0xff]
    %v124 = vld [vmem:[#allocation5 + $0xd0] sm:$0xff]
    %v125 = vld [vmem:[#allocation5 + $0xd8] sm:$0xff]
    %v126 = vld [vmem:[#allocation5 + $0xe0] sm:$0xff]
    %v127 = vld [vmem:[#allocation5 + $0xe8] sm:$0xff]
    %v128 = vld [vmem:[#allocation5 + $0xf0] sm:$0xff]
    %v129 = vld [vmem:[#allocation5 + $0xf8] sm:$0xff]
    %v130 = vld [vmem:[#allocation5 + $0x100] sm:$0xff]
    %v131 = vld [vmem:[#allocation5 + $0x108] sm:$0xff]
    %v132 = vld [vmem:[#allocation5 + $0x110] sm:$0xff]
    %v133 = vld [vmem:[#allocation5 + $0x118] sm:$0xff]
    %v134 = vld [vmem:[#allocation5 + $0x120] sm:$0xff]
    %v135 = vld [vmem:[#allocation5 + $0x128] sm:$0xff]
    %v136 = vld [vmem:[#allocation5 + $0x130] sm:$0xff]
    %v137 = vld [vmem:[#allocation5 + $0x138] sm:$0xff]
    %v138 = vld [vmem:[#allocation5 + $0x140] sm:$0xff]
    %v139 = vld [vmem:[#allocation5 + $0x148] sm:$0xff]
    %v140 = vld [vmem:[#allocation5 + $0x150] sm:$0xff]
    %v141 = vld [vmem:[#allocation5 + $0x158] sm:$0xff]
    %v142 = vld [vmem:[#allocation5 + $0x160] sm:$0xff]
    %v143 = vld [vmem:[#allocation5 + $0x168] sm:$0xff]
    %v144 = vld [vmem:[#allocation5 + $0x170] sm:$0xff]
    %v145 = vld [vmem:[#allocation5 + $0x178] sm:$0xff]
    %v146 = vld [vmem:[#allocation5 + $0x180] sm:$0xff]
    %v147 = vld [vmem:[#allocation5 + $0x188] sm:$0xff]
    %v148 = vld [vmem:[#allocation5 + $0x190] sm:$0xff]
    %v149 = vld [vmem:[#allocation5 + $0x198] sm:$0xff]
    %v150 = vld [vmem:[#allocation5 + $0x1a0] sm:$0xff]
    %v151 = vld [vmem:[#allocation5 + $0x1a8] sm:$0xff]
    %v152 = vld [vmem:[#allocation5 + $0x1b0] sm:$0xff]
    %v153 = vld [vmem:[#allocation5 + $0x1b8] sm:$0xff]
    %v154 = vld [vmem:[#allocation5 + $0x1c0] sm:$0xff]
    %v155 = vld [vmem:[#allocation5 + $0x1c8] sm:$0xff]
    %v156 = vld [vmem:[#allocation5 + $0x1d0] sm:$0xff]
    %v157 = vld [vmem:[#allocation5 + $0x1d8] sm:$0xff]
    %v158 = vld [vmem:[#allocation5 + $0x1e0] sm:$0xff]
    %v159 = vld [vmem:[#allocation5 + $0x1e8] sm:$0xff]
    %v160 = vld [vmem:[#allocation5 + $0x1f0] sm:$0xff]
    %v161 = vld [vmem:[#allocation5 + $0x1f8] sm:$0xff]
    %v162 = vld [vmem:[#allocation5 + $0x200] sm:$0xff]
    %v163 = vld [vmem:[#allocation5 + $0x208] sm:$0xff]
    %v164 = vld [vmem:[#allocation5 + $0x210] sm:$0xff]
    %v165 = vld [vmem:[#allocation5 + $0x218] sm:$0xff]
    %v166 = vld [vmem:[#allocation5 + $0x220] sm:$0xff]
    %v167 = vld [vmem:[#allocation5 + $0x228] sm:$0xff]
    %v168 = vld [vmem:[#allocation5 + $0x230] sm:$0xff]
    %v169 = vld [vmem:[#allocation5 + $0x238] sm:$0xff]
    %v170 = vld [vmem:[#allocation5 + $0x240] sm:$0xff]
    %v171 = vld [vmem:[#allocation5 + $0x248] sm:$0xff]
    %v172 = vld [vmem:[#allocation5 + $0x250] sm:$0xff]
    %v173 = vld [vmem:[#allocation5 + $0x258] sm:$0xff]
    %v174 = vld [vmem:[#allocation5 + $0x260] sm:$0xff]
    %v175 = vld [vmem:[#allocation5 + $0x268] sm:$0xff]
    %v176 = vld [vmem:[#allocation5 + $0x270] sm:$0xff]
    %v177 = vld [vmem:[#allocation5 + $0x278] sm:$0xff]
    %v178 = vld [vmem:[#allocation5 + $0x280] sm:$0xff]
    %v179 = vld [vmem:[#allocation5 + $0x288] sm:$0xff]
    %v180 = vld [vmem:[#allocation5 + $0x290] sm:$0xff]
    %v181 = vld [vmem:[#allocation5 + $0x298] sm:$0xff]
    %v182 = vld [vmem:[#allocation5 + $0x2a0] sm:$0xff]
    %v183 = vld [vmem:[#allocation5 + $0x2a8] sm:$0xff]
    %v184 = vld [vmem:[#allocation5 + $0x2b0] sm:$0xff]
    %v185 = vld [vmem:[#allocation5 + $0x2b8] sm:$0xff]
    %v186 = vld [vmem:[#allocation5 + $0x2c0] sm:$0xff]
    %v187 = vld [vmem:[#allocation5 + $0x2c8] sm:$0xff]
    %v188 = vld [vmem:[#allocation5 + $0x2d0] sm:$0xff]
    %v189 = vld [vmem:[#allocation5 + $0x2d8] sm:$0xff]
    %v190 = vld [vmem:[#allocation5 + $0x2e0] sm:$0xff]
    %v191 = vld [vmem:[#allocation5 + $0x2e8] sm:$0xff]
    %v192 = vld [vmem:[#allocation5 + $0x2f0] sm:$0xff]
    %v193 = vld [vmem:[#allocation5 + $0x2f8] sm:$0xff]
    %v194 = vld [vmem:[#allocation5 + $0x300] sm:$0xff]
    %v195 = vld [vmem:[#allocation5 + $0x308] sm:$0xff]
    %v196 = vld [vmem:[#allocation5 + $0x310] sm:$0xff]
    %v197 = vld [vmem:[#allocation5 + $0x318] sm:$0xff]
    %v198 = vld [vmem:[#allocation5 + $0x320] sm:$0xff]
    %v199 = vld [vmem:[#allocation5 + $0x328] sm:$0xff]
    %v200 = vld [vmem:[#allocation5 + $0x330] sm:$0xff]
    %v201 = vld [vmem:[#allocation5 + $0x338] sm:$0xff]
    %v202 = vld [vmem:[#allocation5 + $0x340] sm:$0xff]
    %v203 = vld [vmem:[#allocation5 + $0x348] sm:$0xff]
    %v204 = vld [vmem:[#allocation5 + $0x350] sm:$0xff]
    %v205 = vld [vmem:[#allocation5 + $0x358] sm:$0xff]
    %v206 = vld [vmem:[#allocation5 + $0x360] sm:$0xff]
    %v207 = vld [vmem:[#allocation5 + $0x368] sm:$0xff]
    %v208 = vld [vmem:[#allocation5 + $0x370] sm:$0xff]
    %v209 = vld [vmem:[#allocation5 + $0x378] sm:$0xff]
    %v210 = vld [vmem:[#allocation5 + $0x380] sm:$0xff]
    %v211 = vld [vmem:[#allocation5 + $0x388] sm:$0xff]
    %v212 = vld [vmem:[#allocation5 + $0x390] sm:$0xff]
    %v213 = vld [vmem:[#allocation5 + $0x398] sm:$0xff]
    %v214 = vld [vmem:[#allocation5 + $0x3a0] sm:$0xff]
    %v215 = vld [vmem:[#allocation5 + $0x3a8] sm:$0xff]
    %v216 = vld [vmem:[#allocation5 + $0x3b0] sm:$0xff]
    %v217 = vld [vmem:[#allocation5 + $0x3b8] sm:$0xff]
    %v218 = vld [vmem:[#allocation5 + $0x3c0] sm:$0xff]
    %v219 = vld [vmem:[#allocation5 + $0x3c8] sm:$0xff]
    %v220 = vld [vmem:[#allocation5 + $0x3d0] sm:$0xff]
    %v221 = vld [vmem:[#allocation5 + $0x3d8] sm:$0xff]
    %v222 = vld [vmem:[#allocation5 + $0x3e0] sm:$0xff]
    %v223 = vld [vmem:[#allocation5 + $0x3e8] sm:$0xff]
    %v224 = vld [vmem:[#allocation5 + $0x3f0] sm:$0xff]
    %v225 = vld [vmem:[#allocation5 + $0x3f8] sm:$0xff]
    %v226 = vld [vmem:[#allocation5 + $0x400] sm:$0xff]
    %v227 = vld [vmem:[#allocation5 + $0x408] sm:$0xff]
    %v228 = vld [vmem:[#allocation5 + $0x410] sm:$0xff]
    %v229 = vld [vmem:[#allocation5 + $0x418] sm:$0xff]
    %v230 = vld [vmem:[#allocation5 + $0x420] sm:$0xff]
    %v231 = vld [vmem:[#allocation5 + $0x428] sm:$0xff]
    %v232 = vld [vmem:[#allocation5 + $0x430] sm:$0xff]
    %v233 = vld [vmem:[#allocation5 + $0x438] sm:$0xff]
    %v234 = vld [vmem:[#allocation5 + $0x440] sm:$0xff]
    %v235 = vld [vmem:[#allocation5 + $0x448] sm:$0xff]
    %v236 = vld [vmem:[#allocation5 + $0x450] sm:$0xff]
    %v237 = vld [vmem:[#allocation5 + $0x458] sm:$0xff]
    %v238 = vld [vmem:[#allocation5 + $0x460] sm:$0xff]
    %v239 = vld [vmem:[#allocation5 + $0x468] sm:$0xff]
    %v240 = vld [vmem:[#allocation5 + $0x470] sm:$0xff]
    %v241 = vld [vmem:[#allocation5 + $0x478] sm:$0xff]
    %v242 = vld [vmem:[#allocation5 + $0x480] sm:$0xff]
    %v243 = vld [vmem:[#allocation5 + $0x488] sm:$0xff]
    %v244 = vld [vmem:[#allocation5 + $0x490] sm:$0xff]
    %v245 = vld [vmem:[#allocation5 + $0x498] sm:$0xff]
    %v246 = vld [vmem:[#allocation5 + $0x4a0] sm:$0xff]
    %v247 = vld [vmem:[#allocation5 + $0x4a8] sm:$0xff]
    %v248 = vld [vmem:[#allocation5 + $0x4b0] sm:$0xff]
    %v249 = vld [vmem:[#allocation5 + $0x4b8] sm:$0xff]
    %v250 = vld [vmem:[#allocation5 + $0x4c0] sm:$0xff]
    %v251 = vld [vmem:[#allocation5 + $0x4c8] sm:$0xff]
    %v252 = vld [vmem:[#allocation5 + $0x4d0] sm:$0xff]
    %v253 = vld [vmem:[#allocation5 + $0x4d8] sm:$0xff]
    %v254 = vld [vmem:[#allocation5 + $0x4e0] sm:$0xff]
    %v255 = vld [vmem:[#allocation5 + $0x4e8] sm:$0xff]
    %v256 = vld [vmem:[#allocation5 + $0x4f0] sm:$0xff]
    %v257 = vld [vmem:[#allocation5 + $0x4f8] sm:$0xff]
    %v258 = vld [vmem:[#allocation5 + $0x500] sm:$0xff]
    %v259 = vld [vmem:[#allocation5 + $0x508] sm:$0xff]
    %v260 = vld [vmem:[#allocation5 + $0x510] sm:$0xff]
    %v261 = vld [vmem:[#allocation5 + $0x518] sm:$0xff]
    %v262 = vld [vmem:[#allocation5 + $0x520] sm:$0xff]
    %v263 = vld [vmem:[#allocation5 + $0x528] sm:$0xff]
    %v264 = vld [vmem:[#allocation5 + $0x530] sm:$0xff]
    %v265 = vld [vmem:[#allocation5 + $0x538] sm:$0xff]
    %v266 = vld [vmem:[#allocation5 + $0x540] sm:$0xff]
    %v267 = vld [vmem:[#allocation5 + $0x548] sm:$0xff]
    %v268 = vld [vmem:[#allocation5 + $0x550] sm:$0xff]
    %v269 = vld [vmem:[#allocation5 + $0x558] sm:$0xff]
    %v270 = vld [vmem:[#allocation5 + $0x560] sm:$0xff]
    %v271 = vld [vmem:[#allocation5 + $0x568] sm:$0xff]
    %v272 = vld [vmem:[#allocation5 + $0x570] sm:$0xff]
    %v273 = vld [vmem:[#allocation5 + $0x578] sm:$0xff]
    %v274 = vld [vmem:[#allocation5 + $0x580] sm:$0xff]
    %v275 = vld [vmem:[#allocation5 + $0x588] sm:$0xff]
    %v276 = vld [vmem:[#allocation5 + $0x590] sm:$0xff]
    %v277 = vld [vmem:[#allocation5 + $0x598] sm:$0xff]
    %v278 = vld [vmem:[#allocation5 + $0x5a0] sm:$0xff]
    %v279 = vld [vmem:[#allocation5 + $0x5a8] sm:$0xff]
    %v280 = vld [vmem:[#allocation5 + $0x5b0] sm:$0xff]
    %v281 = vld [vmem:[#allocation5 + $0x5b8] sm:$0xff]
    %v282 = vld [vmem:[#allocation5 + $0x5c0] sm:$0xff]
    %v283 = vld [vmem:[#allocation5 + $0x5c8] sm:$0xff]
    %v284 = vld [vmem:[#allocation5 + $0x5d0] sm:$0xff]
    %v285 = vld [vmem:[#allocation5 + $0x5d8] sm:$0xff]
    %v286 = vld [vmem:[#allocation5 + $0x5e0] sm:$0xff]
    %v287 = vld [vmem:[#allocation5 + $0x5e8] sm:$0xff]
    %v288 = vld [vmem:[#allocation5 + $0x5f0] sm:$0xff]
    %v289 = vld [vmem:[#allocation5 + $0x5f8] sm:$0xff]
    %v290 = vld [vmem:[#allocation5 + $0x600] sm:$0xff]
    %v291 = vld [vmem:[#allocation5 + $0x608] sm:$0xff]
    %v292 = vld [vmem:[#allocation5 + $0x610] sm:$0xff]
    %v293 = vld [vmem:[#allocation5 + $0x618] sm:$0xff]
    %v294 = vld [vmem:[#allocation5 + $0x620] sm:$0xff]
    %v295 = vld [vmem:[#allocation5 + $0x628] sm:$0xff]
    %v296 = vld [vmem:[#allocation5 + $0x630] sm:$0xff]
    %v297 = vld [vmem:[#allocation5 + $0x638] sm:$0xff]
    %v298 = vld [vmem:[#allocation5 + $0x640] sm:$0xff]
    %v299 = vld [vmem:[#allocation5 + $0x648] sm:$0xff]
    %v300 = vld [vmem:[#allocation5 + $0x650] sm:$0xff]
    %v301 = vld [vmem:[#allocation5 + $0x658] sm:$0xff]
    %v302 = vld [vmem:[#allocation5 + $0x660] sm:$0xff]
    %v303 = vld [vmem:[#allocation5 + $0x668] sm:$0xff]
    %v304 = vld [vmem:[#allocation5 + $0x670] sm:$0xff]
    %v305 = vld [vmem:[#allocation5 + $0x678] sm:$0xff]
    %v306 = vld [vmem:[#allocation5 + $0x680] sm:$0xff]
    %v307 = vld [vmem:[#allocation5 + $0x688] sm:$0xff]
    %v308 = vld [vmem:[#allocation5 + $0x690] sm:$0xff]
    %v309 = vld [vmem:[#allocation5 + $0x698] sm:$0xff]
    %v310 = vld [vmem:[#allocation5 + $0x6a0] sm:$0xff]
    %v311 = vld [vmem:[#allocation5 + $0x6a8] sm:$0xff]
    %v312 = vld [vmem:[#allocation5 + $0x6b0] sm:$0xff]
    %v313 = vld [vmem:[#allocation5 + $0x6b8] sm:$0xff]
    %v314 = vld [vmem:[#allocation5 + $0x6c0] sm:$0xff]
    %v315 = vld [vmem:[#allocation5 + $0x6c8] sm:$0xff]
    %v316 = vld [vmem:[#allocation5 + $0x6d0] sm:$0xff]
    %v317 = vld [vmem:[#allocation5 + $0x6d8] sm:$0xff]
    %v318 = vld [vmem:[#allocation5 + $0x6e0] sm:$0xff]
    %v319 = vld [vmem:[#allocation5 + $0x6e8] sm:$0xff]
    %v320 = vld [vmem:[#allocation5 + $0x6f0] sm:$0xff]
    %v321 = vld [vmem:[#allocation5 + $0x6f8] sm:$0xff]
    %v322 = vld [vmem:[#allocation5 + $0x700] sm:$0xff]
    %v323 = vld [vmem:[#allocation5 + $0x708] sm:$0xff]
    %v324 = vld [vmem:[#allocation5 + $0x710] sm:$0xff]
    %v325 = vld [vmem:[#allocation5 + $0x718] sm:$0xff]
    %v326 = vld [vmem:[#allocation5 + $0x720] sm:$0xff]
    %v327 = vld [vmem:[#allocation5 + $0x728] sm:$0xff]
    %v328 = vld [vmem:[#allocation5 + $0x730] sm:$0xff]
    %v329 = vld [vmem:[#allocation5 + $0x738] sm:$0xff]
    %v330 = vld [vmem:[#allocation5 + $0x740] sm:$0xff]
    %v331 = vld [vmem:[#allocation5 + $0x748] sm:$0xff]
    %v332 = vld [vmem:[#allocation5 + $0x750] sm:$0xff]
    %v333 = vld [vmem:[#allocation5 + $0x758] sm:$0xff]
    %v334 = vld [vmem:[#allocation5 + $0x760] sm:$0xff]
    %v335 = vld [vmem:[#allocation5 + $0x768] sm:$0xff]
    %v336 = vld [vmem:[#allocation5 + $0x770] sm:$0xff]
    %v337 = vld [vmem:[#allocation5 + $0x778] sm:$0xff]
    %v338 = vld [vmem:[#allocation5 + $0x780] sm:$0xff]
    %v339 = vld [vmem:[#allocation5 + $0x788] sm:$0xff]
    %v340 = vld [vmem:[#allocation5 + $0x790] sm:$0xff]
    %v341 = vld [vmem:[#allocation5 + $0x798] sm:$0xff]
    %v342 = vld [vmem:[#allocation5 + $0x7a0] sm:$0xff]
    %v343 = vld [vmem:[#allocation5 + $0x7a8] sm:$0xff]
    %v344 = vld [vmem:[#allocation5 + $0x7b0] sm:$0xff]
    %v345 = vld [vmem:[#allocation5 + $0x7b8] sm:$0xff]
    %v346 = vld [vmem:[#allocation5 + $0x7c0] sm:$0xff]
    %v347 = vld [vmem:[#allocation5 + $0x7c8] sm:$0xff]
    %v348 = vld [vmem:[#allocation5 + $0x7d0] sm:$0xff]
    %v349 = vld [vmem:[#allocation5 + $0x7d8] sm:$0xff]
    %v350 = vld [vmem:[#allocation5 + $0x7e0] sm:$0xff]
    %v351 = vld [vmem:[#allocation5 + $0x7e8] sm:$0xff]
    %v352 = vld [vmem:[#allocation5 + $0x7f0] sm:$0xff]
    %v353 = vld [vmem:[#allocation5 + $0x7f8] sm:$0xff]
    %v354 = vld [vmem:[%s2] sm:$0x1]
    %v356 = vlaneseq
    %v357 = vshrl.u32 %v356, 7
    %v358 = vsub.s32 0, %v357
    %v359 = vrot.slane %v354, %v358
    %v377 = vcombine.low %v82, %v90
    %v378 = vcombine.high %v82, %v90
    %v379 = vcombine.low %v83, %v91
    %v380 = vcombine.high %v83, %v91
    %v381 = vcombine.low %v84, %v92
    %v382 = vcombine.high %v84, %v92
    %v383 = vcombine.low %v85, %v93
    %v384 = vcombine.high %v85, %v93
    %v385 = vcombine.low %v86, %v94
    %v386 = vcombine.high %v86, %v94
    %v387 = vcombine.low %v87, %v95
    %v388 = vcombine.high %v87, %v95
    %v389 = vcombine.low %v88, %v96
    %v390 = vcombine.high %v88, %v96
    %v391 = vcombine.low %v89, %v97
    %v392 = vcombine.high %v89, %v97
    %409 = vmatprep.subr.mxu0 0.0
    %410 = vmatpush1.msra.mxu0 %v98
    %411 = vmatprep.subr.mxu0 0.0
    %412 = vmatpush1.msra.mxu0 %v99
    %413 = vmatprep.subr.mxu0 0.0
    %414 = vmatpush1.msra.mxu0 %v100
    %415 = vmatprep.subr.mxu0 0.0
    %416 = vmatpush1.msra.mxu0 %v101
    %417 = vmatprep.subr.mxu0 0.0
    %418 = vmatpush1.msra.mxu0 %v102
    %419 = vmatprep.subr.mxu0 0.0
    %420 = vmatpush1.msra.mxu0 %v103
    %421 = vmatprep.subr.mxu0 0.0
    %422 = vmatpush1.msra.mxu0 %v104
    %423 = vmatprep.subr.mxu0 0.0
    %424 = vmatpush1.msra.mxu0 %v105
    %425 = vmatprep.subr.mxu0 0.0
    %426 = vmatpush1.msra.mxu0 %v106
    %427 = vmatprep.subr.mxu0 0.0
    %428 = vmatpush1.msra.mxu0 %v107
    %429 = vmatprep.subr.mxu0 0.0
    %430 = vmatpush1.msra.mxu0 %v108
    %431 = vmatprep.subr.mxu0 0.0
    %432 = vmatpush1.msra.mxu0 %v109
    %433 = vmatprep.subr.mxu0 0.0
    %434 = vmatpush1.msra.mxu0 %v110
    %435 = vmatprep.subr.mxu0 0.0
    %436 = vmatpush1.msra.mxu0 %v111
    %437 = vmatprep.subr.mxu0 0.0
    %438 = vmatpush1.msra.mxu0 %v112
    %439 = vmatprep.subr.mxu0 0.0
    %440 = vmatpush1.msra.mxu0 %v113
    %441 = vmatprep.subr.mxu0 0.0
    %442 = vmatpush1.msra.mxu0 %v114
    %443 = vmatprep.subr.mxu0 0.0
    %444 = vmatpush1.msra.mxu0 %v115
    %445 = vmatprep.subr.mxu0 0.0
    %446 = vmatpush1.msra.mxu0 %v116
    %447 = vmatprep.subr.mxu0 0.0
    %448 = vmatpush1.msra.mxu0 %v117
    %449 = vmatprep.subr.mxu0 0.0
    %450 = vmatpush1.msra.mxu0 %v118
    %451 = vmatprep.subr.mxu0 0.0
    %452 = vmatpush1.msra.mxu0 %v119
    %453 = vmatprep.subr.mxu0 0.0
    %454 = vmatpush1.msra.mxu0 %v120
    %455 = vmatprep.subr.mxu0 0.0
    %456 = vmatpush1.msra.mxu0 %v121
    %457 = vmatprep.subr.mxu0 0.0
    %458 = vmatpush1.msra.mxu0 %v122
    %459 = vmatprep.subr.mxu0 0.0
    %460 = vmatpush1.msra.mxu0 %v123
    %461 = vmatprep.subr.mxu0 0.0
    %462 = vmatpush1.msra.mxu0 %v124
    %463 = vmatprep.subr.mxu0 0.0
    %464 = vmatpush1.msra.mxu0 %v125
    %465 = vmatprep.subr.mxu0 0.0
    %466 = vmatpush1.msra.mxu0 %v126
    %467 = vmatprep.subr.mxu0 0.0
    %468 = vmatpush1.msra.mxu0 %v127
    %469 = vmatprep.subr.mxu0 0.0
    %470 = vmatpush1.msra.mxu0 %v128
    %471 = vmatprep.subr.mxu0 0.0
    %472 = vmatpush1.msra.mxu0 %v129
    %473 = vmatprep.mubr.f32.mxu0 %v378
    %474 = vmatmul.mubr.f32.gmra.mrb[0].mxu0 %v377
    %v475 = vpop.f32.mrb[0].mxu0
    %v476 = vadd.f32 %v359, %v475
    %v477 = vpop.f32.mrb[0].mxu0
    %478 = vdwg.mxu0
    %479 = vmatprep.subr.mxu0 0.0
    %480 = vmatpush1.msra.mxu0 %v130
    %481 = vmatprep.subr.mxu0 0.0
    %482 = vmatpush1.msra.mxu0 %v131
    %483 = vmatprep.subr.mxu0 0.0
    %484 = vmatpush1.msra.mxu0 %v132
    %485 = vmatprep.subr.mxu0 0.0
    %486 = vmatpush1.msra.mxu0 %v133
    %487 = vmatprep.subr.mxu0 0.0
    %488 = vmatpush1.msra.mxu0 %v134
    %489 = vmatprep.subr.mxu0 0.0
    %490 = vmatpush1.msra.mxu0 %v135
    %491 = vmatprep.subr.mxu0 0.0
    %492 = vmatpush1.msra.mxu0 %v136
    %493 = vmatprep.subr.mxu0 0.0
    %494 = vmatpush1.msra.mxu0 %v137
    %495 = vmatprep.subr.mxu0 0.0
    %496 = vmatpush1.msra.mxu0 %v138
    %497 = vmatprep.subr.mxu0 0.0
    %498 = vmatpush1.msra.mxu0 %v139
    %499 = vmatprep.subr.mxu0 0.0
    %500 = vmatpush1.msra.mxu0 %v140
    %501 = vmatprep.subr.mxu0 0.0
    %502 = vmatpush1.msra.mxu0 %v141
    %503 = vmatprep.subr.mxu0 0.0
    %504 = vmatpush1.msra.mxu0 %v142
    %505 = vmatprep.subr.mxu0 0.0
    %506 = vmatpush1.msra.mxu0 %v143
    %507 = vmatprep.subr.mxu0 0.0
    %508 = vmatpush1.msra.mxu0 %v144
    %509 = vmatprep.subr.mxu0 0.0
    %510 = vmatpush1.msra.mxu0 %v145
    %511 = vmatprep.subr.mxu0 0.0
    %512 = vmatpush1.msra.mxu0 %v146
    %513 = vmatprep.subr.mxu0 0.0
    %514 = vmatpush1.msra.mxu0 %v147
    %515 = vmatprep.subr.mxu0 0.0
    %516 = vmatpush1.msra.mxu0 %v148
    %517 = vmatprep.subr.mxu0 0.0
    %518 = vmatpush1.msra.mxu0 %v149
    %519 = vmatprep.subr.mxu0 0.0
    %520 = vmatpush1.msra.mxu0 %v150
    %521 = vmatprep.subr.mxu0 0.0
    %522 = vmatpush1.msra.mxu0 %v151
    %523 = vmatprep.subr.mxu0 0.0
    %524 = vmatpush1.msra.mxu0 %v152
    %525 = vmatprep.subr.mxu0 0.0
    %526 = vmatpush1.msra.mxu0 %v153
    %527 = vmatprep.subr.mxu0 0.0
    %528 = vmatpush1.msra.mxu0 %v154
    %529 = vmatprep.subr.mxu0 0.0
    %530 = vmatpush1.msra.mxu0 %v155
    %531 = vmatprep.subr.mxu0 0.0
    %532 = vmatpush1.msra.mxu0 %v156
    %533 = vmatprep.subr.mxu0 0.0
    %534 = vmatpush1.msra.mxu0 %v157
    %535 = vmatprep.subr.mxu0 0.0
    %536 = vmatpush1.msra.mxu0 %v158
    %537 = vmatprep.subr.mxu0 0.0
    %538 = vmatpush1.msra.mxu0 %v159
    %539 = vmatprep.subr.mxu0 0.0
    %540 = vmatpush1.msra.mxu0 %v160
    %541 = vmatprep.subr.mxu0 0.0
    %542 = vmatpush1.msra.mxu0 %v161
    %543 = vmatprep.mubr.f32.mxu0 %v380
    %544 = vmatmul.mubr.f32.gmra.mrb[0].mxu0 %v379
    %v545 = vpop.f32.mrb[0].mxu0
    %v546 = vadd.f32 %v476, %v545
    %v547 = vpop.f32.mrb[0].mxu0
    %548 = vdwg.mxu0
    %549 = vmatprep.subr.mxu0 0.0
    %550 = vmatpush1.msra.mxu0 %v162
    %551 = vmatprep.subr.mxu0 0.0
    %552 = vmatpush1.msra.mxu0 %v163
    %553 = vmatprep.subr.mxu0 0.0
    %554 = vmatpush1.msra.mxu0 %v164
    %555 = vmatprep.subr.mxu0 0.0
    %556 = vmatpush1.msra.mxu0 %v165
    %557 = vmatprep.subr.mxu0 0.0
    %558 = vmatpush1.msra.mxu0 %v166
    %559 = vmatprep.subr.mxu0 0.0
    %560 = vmatpush1.msra.mxu0 %v167
    %561 = vmatprep.subr.mxu0 0.0
    %562 = vmatpush1.msra.mxu0 %v168
    %563 = vmatprep.subr.mxu0 0.0
    %564 = vmatpush1.msra.mxu0 %v169
    %565 = vmatprep.subr.mxu0 0.0
    %566 = vmatpush1.msra.mxu0 %v170
    %567 = vmatprep.subr.mxu0 0.0
    %568 = vmatpush1.msra.mxu0 %v171
    %569 = vmatprep.subr.mxu0 0.0
    %570 = vmatpush1.msra.mxu0 %v172
    %571 = vmatprep.subr.mxu0 0.0
    %572 = vmatpush1.msra.mxu0 %v173
    %573 = vmatprep.subr.mxu0 0.0
    %574 = vmatpush1.msra.mxu0 %v174
    %575 = vmatprep.subr.mxu0 0.0
    %576 = vmatpush1.msra.mxu0 %v175
    %577 = vmatprep.subr.mxu0 0.0
    %578 = vmatpush1.msra.mxu0 %v176
    %579 = vmatprep.subr.mxu0 0.0
    %580 = vmatpush1.msra.mxu0 %v177
    %581 = vmatprep.subr.mxu0 0.0
    %582 = vmatpush1.msra.mxu0 %v178
    %583 = vmatprep.subr.mxu0 0.0
    %584 = vmatpush1.msra.mxu0 %v179
    %585 = vmatprep.subr.mxu0 0.0
    %586 = vmatpush1.msra.mxu0 %v180
    %587 = vmatprep.subr.mxu0 0.0
    %588 = vmatpush1.msra.mxu0 %v181
    %589 = vmatprep.subr.mxu0 0.0
    %590 = vmatpush1.msra.mxu0 %v182
    %591 = vmatprep.subr.mxu0 0.0
    %592 = vmatpush1.msra.mxu0 %v183
    %593 = vmatprep.subr.mxu0 0.0
    %594 = vmatpush1.msra.mxu0 %v184
    %595 = vmatprep.subr.mxu0 0.0
    %596 = vmatpush1.msra.mxu0 %v185
    %597 = vmatprep.subr.mxu0 0.0
    %598 = vmatpush1.msra.mxu0 %v186
    %599 = vmatprep.subr.mxu0 0.0
    %600 = vmatpush1.msra.mxu0 %v187
    %601 = vmatprep.subr.mxu0 0.0
    %602 = vmatpush1.msra.mxu0 %v188
    %603 = vmatprep.subr.mxu0 0.0
    %604 = vmatpush1.msra.mxu0 %v189
    %605 = vmatprep.subr.mxu0 0.0
    %606 = vmatpush1.msra.mxu0 %v190
    %607 = vmatprep.subr.mxu0 0.0
    %608 = vmatpush1.msra.mxu0 %v191
    %609 = vmatprep.subr.mxu0 0.0
    %610 = vmatpush1.msra.mxu0 %v192
    %611 = vmatprep.subr.mxu0 0.0
    %612 = vmatpush1.msra.mxu0 %v193
    %613 = vmatprep.mubr.f32.mxu0 %v382
    %614 = vmatmul.mubr.f32.gmra.mrb[0].mxu0 %v381
    %v615 = vpop.f32.mrb[0].mxu0
    %v616 = vadd.f32 %v546, %v615
    %v617 = vpop.f32.mrb[0].mxu0
    %618 = vdwg.mxu0
    %619 = vmatprep.subr.mxu0 0.0
    %620 = vmatpush1.msra.mxu0 %v194
    %621 = vmatprep.subr.mxu0 0.0
    %622 = vmatpush1.msra.mxu0 %v195
    %623 = vmatprep.subr.mxu0 0.0
    %624 = vmatpush1.msra.mxu0 %v196
    %625 = vmatprep.subr.mxu0 0.0
    %626 = vmatpush1.msra.mxu0 %v197
    %627 = vmatprep.subr.mxu0 0.0
    %628 = vmatpush1.msra.mxu0 %v198
    %629 = vmatprep.subr.mxu0 0.0
    %630 = vmatpush1.msra.mxu0 %v199
    %631 = vmatprep.subr.mxu0 0.0
    %632 = vmatpush1.msra.mxu0 %v200
    %633 = vmatprep.subr.mxu0 0.0
    %634 = vmatpush1.msra.mxu0 %v201
    %635 = vmatprep.subr.mxu0 0.0
    %636 = vmatpush1.msra.mxu0 %v202
    %637 = vmatprep.subr.mxu0 0.0
    %638 = vmatpush1.msra.mxu0 %v203
    %639 = vmatprep.subr.mxu0 0.0
    %640 = vmatpush1.msra.mxu0 %v204
    %641 = vmatprep.subr.mxu0 0.0
    %642 = vmatpush1.msra.mxu0 %v205
    %643 = vmatprep.subr.mxu0 0.0
    %644 = vmatpush1.msra.mxu0 %v206
    %645 = vmatprep.subr.mxu0 0.0
    %646 = vmatpush1.msra.mxu0 %v207
    %647 = vmatprep.subr.mxu0 0.0
    %648 = vmatpush1.msra.mxu0 %v208
    %649 = vmatprep.subr.mxu0 0.0
    %650 = vmatpush1.msra.mxu0 %v209
    %651 = vmatprep.subr.mxu0 0.0
    %652 = vmatpush1.msra.mxu0 %v210
    %653 = vmatprep.subr.mxu0 0.0
    %654 = vmatpush1.msra.mxu0 %v211
    %655 = vmatprep.subr.mxu0 0.0
    %656 = vmatpush1.msra.mxu0 %v212
    %657 = vmatprep.subr.mxu0 0.0
    %658 = vmatpush1.msra.mxu0 %v213
    %659 = vmatprep.subr.mxu0 0.0
    %660 = vmatpush1.msra.mxu0 %v214
    %661 = vmatprep.subr.mxu0 0.0
    %662 = vmatpush1.msra.mxu0 %v215
    %663 = vmatprep.subr.mxu0 0.0
    %664 = vmatpush1.msra.mxu0 %v216
    %665 = vmatprep.subr.mxu0 0.0
    %666 = vmatpush1.msra.mxu0 %v217
    %667 = vmatprep.subr.mxu0 0.0
    %668 = vmatpush1.msra.mxu0 %v218
    %669 = vmatprep.subr.mxu0 0.0
    %670 = vmatpush1.msra.mxu0 %v219
    %671 = vmatprep.subr.mxu0 0.0
    %672 = vmatpush1.msra.mxu0 %v220
    %673 = vmatprep.subr.mxu0 0.0
    %674 = vmatpush1.msra.mxu0 %v221
    %675 = vmatprep.subr.mxu0 0.0
    %676 = vmatpush1.msra.mxu0 %v222
    %677 = vmatprep.subr.mxu0 0.0
    %678 = vmatpush1.msra.mxu0 %v223
    %679 = vmatprep.subr.mxu0 0.0
    %680 = vmatpush1.msra.mxu0 %v224
    %681 = vmatprep.subr.mxu0 0.0
    %682 = vmatpush1.msra.mxu0 %v225
    %683 = vmatprep.mubr.f32.mxu0 %v384
    %684 = vmatmul.mubr.f32.gmra.mrb[0].mxu0 %v383
    %v685 = vpop.f32.mrb[0].mxu0
    %v686 = vadd.f32 %v616, %v685
    %v687 = vpop.f32.mrb[0].mxu0
    %688 = vdwg.mxu0
    %689 = vmatprep.subr.mxu0 0.0
    %690 = vmatpush1.msra.mxu0 %v226
    %691 = vmatprep.subr.mxu0 0.0
    %692 = vmatpush1.msra.mxu0 %v227
    %693 = vmatprep.subr.mxu0 0.0
    %694 = vmatpush1.msra.mxu0 %v228
    %695 = vmatprep.subr.mxu0 0.0
    %696 = vmatpush1.msra.mxu0 %v229
    %697 = vmatprep.subr.mxu0 0.0
    %698 = vmatpush1.msra.mxu0 %v230
    %699 = vmatprep.subr.mxu0 0.0
    %700 = vmatpush1.msra.mxu0 %v231
    %701 = vmatprep.subr.mxu0 0.0
    %702 = vmatpush1.msra.mxu0 %v232
    %703 = vmatprep.subr.mxu0 0.0
    %704 = vmatpush1.msra.mxu0 %v233
    %705 = vmatprep.subr.mxu0 0.0
    %706 = vmatpush1.msra.mxu0 %v234
    %707 = vmatprep.subr.mxu0 0.0
    %708 = vmatpush1.msra.mxu0 %v235
    %709 = vmatprep.subr.mxu0 0.0
    %710 = vmatpush1.msra.mxu0 %v236
    %711 = vmatprep.subr.mxu0 0.0
    %712 = vmatpush1.msra.mxu0 %v237
    %713 = vmatprep.subr.mxu0 0.0
    %714 = vmatpush1.msra.mxu0 %v238
    %715 = vmatprep.subr.mxu0 0.0
    %716 = vmatpush1.msra.mxu0 %v239
    %717 = vmatprep.subr.mxu0 0.0
    %718 = vmatpush1.msra.mxu0 %v240
    %719 = vmatprep.subr.mxu0 0.0
    %720 = vmatpush1.msra.mxu0 %v241
    %721 = vmatprep.subr.mxu0 0.0
    %722 = vmatpush1.msra.mxu0 %v242
    %723 = vmatprep.subr.mxu0 0.0
    %724 = vmatpush1.msra.mxu0 %v243
    %725 = vmatprep.subr.mxu0 0.0
    %726 = vmatpush1.msra.mxu0 %v244
    %727 = vmatprep.subr.mxu0 0.0
    %728 = vmatpush1.msra.mxu0 %v245
    %729 = vmatprep.subr.mxu0 0.0
    %730 = vmatpush1.msra.mxu0 %v246
    %731 = vmatprep.subr.mxu0 0.0
    %732 = vmatpush1.msra.mxu0 %v247
    %733 = vmatprep.subr.mxu0 0.0
    %734 = vmatpush1.msra.mxu0 %v248
    %735 = vmatprep.subr.mxu0 0.0
    %736 = vmatpush1.msra.mxu0 %v249
    %737 = vmatprep.subr.mxu0 0.0
    %738 = vmatpush1.msra.mxu0 %v250
    %739 = vmatprep.subr.mxu0 0.0
    %740 = vmatpush1.msra.mxu0 %v251
    %741 = vmatprep.subr.mxu0 0.0
    %742 = vmatpush1.msra.mxu0 %v252
    %743 = vmatprep.subr.mxu0 0.0
    %744 = vmatpush1.msra.mxu0 %v253
    %745 = vmatprep.subr.mxu0 0.0
    %746 = vmatpush1.msra.mxu0 %v254
    %747 = vmatprep.subr.mxu0 0.0
    %748 = vmatpush1.msra.mxu0 %v255
    %749 = vmatprep.subr.mxu0 0.0
    %750 = vmatpush1.msra.mxu0 %v256
    %751 = vmatprep.subr.mxu0 0.0
    %752 = vmatpush1.msra.mxu0 %v257
    %753 = vmatprep.mubr.f32.mxu0 %v386
    %754 = vmatmul.mubr.f32.gmra.mrb[0].mxu0 %v385
    %v755 = vpop.f32.mrb[0].mxu0
    %v756 = vadd.f32 %v686, %v755
    %v757 = vpop.f32.mrb[0].mxu0
    %758 = vdwg.mxu0
    %759 = vmatprep.subr.mxu0 0.0
    %760 = vmatpush1.msra.mxu0 %v258
    %761 = vmatprep.subr.mxu0 0.0
    %762 = vmatpush1.msra.mxu0 %v259
    %763 = vmatprep.subr.mxu0 0.0
    %764 = vmatpush1.msra.mxu0 %v260
    %765 = vmatprep.subr.mxu0 0.0
    %766 = vmatpush1.msra.mxu0 %v261
    %767 = vmatprep.subr.mxu0 0.0
    %768 = vmatpush1.msra.mxu0 %v262
    %769 = vmatprep.subr.mxu0 0.0
    %770 = vmatpush1.msra.mxu0 %v263
    %771 = vmatprep.subr.mxu0 0.0
    %772 = vmatpush1.msra.mxu0 %v264
    %773 = vmatprep.subr.mxu0 0.0
    %774 = vmatpush1.msra.mxu0 %v265
    %775 = vmatprep.subr.mxu0 0.0
    %776 = vmatpush1.msra.mxu0 %v266
    %777 = vmatprep.subr.mxu0 0.0
    %778 = vmatpush1.msra.mxu0 %v267
    %779 = vmatprep.subr.mxu0 0.0
    %780 = vmatpush1.msra.mxu0 %v268
    %781 = vmatprep.subr.mxu0 0.0
    %782 = vmatpush1.msra.mxu0 %v269
    %783 = vmatprep.subr.mxu0 0.0
    %784 = vmatpush1.msra.mxu0 %v270
    %785 = vmatprep.subr.mxu0 0.0
    %786 = vmatpush1.msra.mxu0 %v271
    %787 = vmatprep.subr.mxu0 0.0
    %788 = vmatpush1.msra.mxu0 %v272
    %789 = vmatprep.subr.mxu0 0.0
    %790 = vmatpush1.msra.mxu0 %v273
    %791 = vmatprep.subr.mxu0 0.0
    %792 = vmatpush1.msra.mxu0 %v274
    %793 = vmatprep.subr.mxu0 0.0
    %794 = vmatpush1.msra.mxu0 %v275
    %795 = vmatprep.subr.mxu0 0.0
    %796 = vmatpush1.msra.mxu0 %v276
    %797 = vmatprep.subr.mxu0 0.0
    %798 = vmatpush1.msra.mxu0 %v277
    %799 = vmatprep.subr.mxu0 0.0
    %800 = vmatpush1.msra.mxu0 %v278
    %801 = vmatprep.subr.mxu0 0.0
    %802 = vmatpush1.msra.mxu0 %v279
    %803 = vmatprep.subr.mxu0 0.0
    %804 = vmatpush1.msra.mxu0 %v280
    %805 = vmatprep.subr.mxu0 0.0
    %806 = vmatpush1.msra.mxu0 %v281
    %807 = vmatprep.subr.mxu0 0.0
    %808 = vmatpush1.msra.mxu0 %v282
    %809 = vmatprep.subr.mxu0 0.0
    %810 = vmatpush1.msra.mxu0 %v283
    %811 = vmatprep.subr.mxu0 0.0
    %812 = vmatpush1.msra.mxu0 %v284
    %813 = vmatprep.subr.mxu0 0.0
    %814 = vmatpush1.msra.mxu0 %v285
    %815 = vmatprep.subr.mxu0 0.0
    %816 = vmatpush1.msra.mxu0 %v286
    %817 = vmatprep.subr.mxu0 0.0
    %818 = vmatpush1.msra.mxu0 %v287
    %819 = vmatprep.subr.mxu0 0.0
    %820 = vmatpush1.msra.mxu0 %v288
    %821 = vmatprep.subr.mxu0 0.0
    %822 = vmatpush1.msra.mxu0 %v289
    %823 = vmatprep.mubr.f32.mxu0 %v388
    %824 = vmatmul.mubr.f32.gmra.mrb[0].mxu0 %v387
    %v825 = vpop.f32.mrb[0].mxu0
    %v826 = vadd.f32 %v756, %v825
    %v827 = vpop.f32.mrb[0].mxu0
    %828 = vdwg.mxu0
    %829 = vmatprep.subr.mxu0 0.0
    %830 = vmatpush1.msra.mxu0 %v290
    %831 = vmatprep.subr.mxu0 0.0
    %832 = vmatpush1.msra.mxu0 %v291
    %833 = vmatprep.subr.mxu0 0.0
    %834 = vmatpush1.msra.mxu0 %v292
    %835 = vmatprep.subr.mxu0 0.0
    %836 = vmatpush1.msra.mxu0 %v293
    %837 = vmatprep.subr.mxu0 0.0
    %838 = vmatpush1.msra.mxu0 %v294
    %839 = vmatprep.subr.mxu0 0.0
    %840 = vmatpush1.msra.mxu0 %v295
    %841 = vmatprep.subr.mxu0 0.0
    %842 = vmatpush1.msra.mxu0 %v296
    %843 = vmatprep.subr.mxu0 0.0
    %844 = vmatpush1.msra.mxu0 %v297
    %845 = vmatprep.subr.mxu0 0.0
    %846 = vmatpush1.msra.mxu0 %v298
    %847 = vmatprep.subr.mxu0 0.0
    %848 = vmatpush1.msra.mxu0 %v299
    %849 = vmatprep.subr.mxu0 0.0
    %850 = vmatpush1.msra.mxu0 %v300
    %851 = vmatprep.subr.mxu0 0.0
    %852 = vmatpush1.msra.mxu0 %v301
    %853 = vmatprep.subr.mxu0 0.0
    %854 = vmatpush1.msra.mxu0 %v302
    %855 = vmatprep.subr.mxu0 0.0
    %856 = vmatpush1.msra.mxu0 %v303
    %857 = vmatprep.subr.mxu0 0.0
    %858 = vmatpush1.msra.mxu0 %v304
    %859 = vmatprep.subr.mxu0 0.0
    %860 = vmatpush1.msra.mxu0 %v305
    %861 = vmatprep.subr.mxu0 0.0
    %862 = vmatpush1.msra.mxu0 %v306
    %863 = vmatprep.subr.mxu0 0.0
    %864 = vmatpush1.msra.mxu0 %v307
    %865 = vmatprep.subr.mxu0 0.0
    %866 = vmatpush1.msra.mxu0 %v308
    %867 = vmatprep.subr.mxu0 0.0
    %868 = vmatpush1.msra.mxu0 %v309
    %869 = vmatprep.subr.mxu0 0.0
    %870 = vmatpush1.msra.mxu0 %v310
    %871 = vmatprep.subr.mxu0 0.0
    %872 = vmatpush1.msra.mxu0 %v311
    %873 = vmatprep.subr.mxu0 0.0
    %874 = vmatpush1.msra.mxu0 %v312
    %875 = vmatprep.subr.mxu0 0.0
    %876 = vmatpush1.msra.mxu0 %v313
    %877 = vmatprep.subr.mxu0 0.0
    %878 = vmatpush1.msra.mxu0 %v314
    %879 = vmatprep.subr.mxu0 0.0
    %880 = vmatpush1.msra.mxu0 %v315
    %881 = vmatprep.subr.mxu0 0.0
    %882 = vmatpush1.msra.mxu0 %v316
    %883 = vmatprep.subr.mxu0 0.0
    %884 = vmatpush1.msra.mxu0 %v317
    %885 = vmatprep.subr.mxu0 0.0
    %886 = vmatpush1.msra.mxu0 %v318
    %887 = vmatprep.subr.mxu0 0.0
    %888 = vmatpush1.msra.mxu0 %v319
    %889 = vmatprep.subr.mxu0 0.0
    %890 = vmatpush1.msra.mxu0 %v320
    %891 = vmatprep.subr.mxu0 0.0
    %892 = vmatpush1.msra.mxu0 %v321
    %893 = vmatprep.mubr.f32.mxu0 %v390
    %894 = vmatmul.mubr.f32.gmra.mrb[0].mxu0 %v389
    %v895 = vpop.f32.mrb[0].mxu0
    %v896 = vadd.f32 %v826, %v895
    %v897 = vpop.f32.mrb[0].mxu0
    %898 = vdwg.mxu0
    %899 = vmatprep.subr.mxu0 0.0
    %900 = vmatpush1.msra.mxu0 %v322
    %901 = vmatprep.subr.mxu0 0.0
    %902 = vmatpush1.msra.mxu0 %v323
    %903 = vmatprep.subr.mxu0 0.0
    %904 = vmatpush1.msra.mxu0 %v324
    %905 = vmatprep.subr.mxu0 0.0
    %906 = vmatpush1.msra.mxu0 %v325
    %907 = vmatprep.subr.mxu0 0.0
    %908 = vmatpush1.msra.mxu0 %v326
    %909 = vmatprep.subr.mxu0 0.0
    %910 = vmatpush1.msra.mxu0 %v327
    %911 = vmatprep.subr.mxu0 0.0
    %912 = vmatpush1.msra.mxu0 %v328
    %913 = vmatprep.subr.mxu0 0.0
    %914 = vmatpush1.msra.mxu0 %v329
    %915 = vmatprep.subr.mxu0 0.0
    %916 = vmatpush1.msra.mxu0 %v330
    %917 = vmatprep.subr.mxu0 0.0
    %918 = vmatpush1.msra.mxu0 %v331
    %919 = vmatprep.subr.mxu0 0.0
    %920 = vmatpush1.msra.mxu0 %v332
    %921 = vmatprep.subr.mxu0 0.0
    %922 = vmatpush1.msra.mxu0 %v333
    %923 = vmatprep.subr.mxu0 0.0
    %924 = vmatpush1.msra.mxu0 %v334
    %925 = vmatprep.subr.mxu0 0.0
    %926 = vmatpush1.msra.mxu0 %v335
    %927 = vmatprep.subr.mxu0 0.0
    %928 = vmatpush1.msra.mxu0 %v336
    %929 = vmatprep.subr.mxu0 0.0
    %930 = vmatpush1.msra.mxu0 %v337
    %931 = vmatprep.subr.mxu0 0.0
    %932 = vmatpush1.msra.mxu0 %v338
    %933 = vmatprep.subr.mxu0 0.0
    %934 = vmatpush1.msra.mxu0 %v339
    %935 = vmatprep.subr.mxu0 0.0
    %936 = vmatpush1.msra.mxu0 %v340
    %937 = vmatprep.subr.mxu0 0.0
    %938 = vmatpush1.msra.mxu0 %v341
    %939 = vmatprep.subr.mxu0 0.0
    %940 = vmatpush1.msra.mxu0 %v342
    %941 = vmatprep.subr.mxu0 0.0
    %942 = vmatpush1.msra.mxu0 %v343
    %943 = vmatprep.subr.mxu0 0.0
    %944 = vmatpush1.msra.mxu0 %v344
    %945 = vmatprep.subr.mxu0 0.0
    %946 = vmatpush1.msra.mxu0 %v345
    %947 = vmatprep.subr.mxu0 0.0
    %948 = vmatpush1.msra.mxu0 %v346
    %949 = vmatprep.subr.mxu0 0.0
    %950 = vmatpush1.msra.mxu0 %v347
    %951 = vmatprep.subr.mxu0 0.0
    %952 = vmatpush1.msra.mxu0 %v348
    %953 = vmatprep.subr.mxu0 0.0
    %954 = vmatpush1.msra.mxu0 %v349
    %955 = vmatprep.subr.mxu0 0.0
    %956 = vmatpush1.msra.mxu0 %v350
    %957 = vmatprep.subr.mxu0 0.0
    %958 = vmatpush1.msra.mxu0 %v351
    %959 = vmatprep.subr.mxu0 0.0
    %960 = vmatpush1.msra.mxu0 %v352
    %961 = vmatprep.subr.mxu0 0.0
    %962 = vmatpush1.msra.mxu0 %v353
    %963 = vmatprep.mubr.f32.mxu0 %v392
    %964 = vmatmul.mubr.f32.gmra.mrb[0].mxu0 %v391
    %v965 = vpop.f32.mrb[0].mxu0
    %v966 = vadd.f32 %v896, %v965
    %v967 = vpop.f32.mrb[0].mxu0
    %968 = vdwg.mxu0
    %v969 = vmax.f32 %v966, 0.0
    %v970 = vld [vmem:[#allocation7] sm:$0xff]
    %v971 = vld [vmem:[#allocation7 + $0x8] sm:$0xff]
    %v972 = vld [vmem:[#allocation7 + $0x10] sm:$0xff]
    %v973 = vld [vmem:[#allocation7 + $0x18] sm:$0xff]
    %v974 = vld [vmem:[#allocation7 + $0x20] sm:$0xff]
    %v975 = vld [vmem:[#allocation7 + $0x28] sm:$0xff]
    %v976 = vld [vmem:[#allocation7 + $0x30] sm:$0xff]
    %v977 = vld [vmem:[#allocation7 + $0x38] sm:$0xff]
    %v978 = vld [vmem:[#allocation7 + $0x40] sm:$0xff]
    %v979 = vld [vmem:[#allocation7 + $0x48] sm:$0xff]
    %v980 = vld [vmem:[#allocation7 + $0x50] sm:$0xff]
    %v981 = vld [vmem:[#allocation7 + $0x58] sm:$0xff]
    %v982 = vld [vmem:[#allocation7 + $0x60] sm:$0xff]
    %v983 = vld [vmem:[#allocation7 + $0x68] sm:$0xff]
    %v984 = vld [vmem:[#allocation7 + $0x70] sm:$0xff]
    %v985 = vld [vmem:[#allocation7 + $0x78] sm:$0xff]
    %v986 = vld [vmem:[%s4] sm:$0x1]
    %v988 = vlaneseq
    %v989 = vshrl.u32 %v988, 7
    %v990 = vsub.s32 0, %v989
    %v991 = vrot.slane %v986, %v990
    %993 = vmatprep.subr.mxu0 0.0
    %994 = vmatpush1.msra.mxu0 %v970
    %995 = vmatprep.subr.mxu0 0.0
    %996 = vmatpush1.msra.mxu0 %v971
    %997 = vmatprep.subr.mxu0 0.0
    %998 = vmatpush1.msra.mxu0 %v972
    %999 = vmatprep.subr.mxu0 0.0
    %1000 = vmatpush1.msra.mxu0 %v973
    %1001 = vmatprep.subr.mxu0 0.0
    %1002 = vmatpush1.msra.mxu0 %v974
    %1003 = vmatprep.subr.mxu0 0.0
    %1004 = vmatpush1.msra.mxu0 %v975
    %1005 = vmatprep.subr.mxu0 0.0
    %1006 = vmatpush1.msra.mxu0 %v976
    %1007 = vmatprep.subr.mxu0 0.0
    %1008 = vmatpush1.msra.mxu0 %v977
    %1009 = vmatprep.subr.mxu0 0.0
    %1010 = vmatpush1.msra.mxu0 %v978
    %1011 = vmatprep.subr.mxu0 0.0
    %1012 = vmatpush1.msra.mxu0 %v979
    %1013 = vmatprep.subr.mxu0 0.0
    %1014 = vmatpush1.msra.mxu0 %v980
    %1015 = vmatprep.subr.mxu0 0.0
    %1016 = vmatpush1.msra.mxu0 %v981
    %1017 = vmatprep.subr.mxu0 0.0
    %1018 = vmatpush1.msra.mxu0 %v982
    %1019 = vmatprep.subr.mxu0 0.0
    %1020 = vmatpush1.msra.mxu0 %v983
    %1021 = vmatprep.subr.mxu0 0.0
    %1022 = vmatpush1.msra.mxu0 %v984
    %1023 = vmatprep.subr.mxu0 0.0
    %1024 = vmatpush1.msra.mxu0 %v985
    %1025 = vmatprep.subr.mxu0 0.0
    %1026 = vmatpush1.msra.mxu0 0.0
    %1027 = vmatprep.subr.mxu0 0.0
    %1028 = vmatpush1.msra.mxu0 0.0
    %1029 = vmatprep.subr.mxu0 0.0
    %1030 = vmatpush1.msra.mxu0 0.0
    %1031 = vmatprep.subr.mxu0 0.0
    %1032 = vmatpush1.msra.mxu0 0.0
    %1033 = vmatprep.subr.mxu0 0.0
    %1034 = vmatpush1.msra.mxu0 0.0
    %1035 = vmatprep.subr.mxu0 0.0
    %1036 = vmatpush1.msra.mxu0 0.0
    %1037 = vmatprep.subr.mxu0 0.0
    %1038 = vmatpush1.msra.mxu0 0.0
    %1039 = vmatprep.subr.mxu0 0.0
    %1040 = vmatpush1.msra.mxu0 0.0
    %1041 = vmatprep.subr.mxu0 0.0
    %1042 = vmatpush1.msra.mxu0 0.0
    %1043 = vmatprep.subr.mxu0 0.0
    %1044 = vmatpush1.msra.mxu0 0.0
    %1045 = vmatprep.subr.mxu0 0.0
    %1046 = vmatpush1.msra.mxu0 0.0
    %1047 = vmatprep.subr.mxu0 0.0
    %1048 = vmatpush1.msra.mxu0 0.0
    %1049 = vmatprep.subr.mxu0 0.0
    %1050 = vmatpush1.msra.mxu0 0.0
    %1051 = vmatprep.subr.mxu0 0.0
    %1052 = vmatpush1.msra.mxu0 0.0
    %1053 = vmatprep.subr.mxu0 0.0
    %1054 = vmatpush1.msra.mxu0 0.0
    %1055 = vmatprep.subr.mxu0 0.0
    %1056 = vmatpush1.msra.mxu0 0.0
    %1057 = vmatprep.mubr.f32.mxu0 0.0
    %1058 = vmatmul.mubr.f32.gmra.mrb[0].mxu0 %v969
    %v1059 = vpop.f32.mrb[0].mxu0
    %v1060 = vadd.f32 %v991, %v1059
    %v1061 = vpop.f32.mrb[0].mxu0
    %1062 = vdwg.mxu0
    %v1063 = vmax.f32 %v1060, 0.0
    %v1064 = vld [vmem:[#allocation8] sm:$0xff]
    %v1065 = vld [vmem:[#allocation8 + $0x8] sm:$0xff]
    %v1066 = vld [vmem:[#allocation8 + $0x10] sm:$0xff]
    %v1067 = vld [vmem:[#allocation8 + $0x18] sm:$0xff]
    %v1068 = vld [vmem:[#allocation8 + $0x20] sm:$0xff]
    %v1069 = vld [vmem:[#allocation8 + $0x28] sm:$0xff]
    %v1070 = vld [vmem:[#allocation8 + $0x30] sm:$0xff]
    %v1071 = vld [vmem:[#allocation8 + $0x38] sm:$0xff]
    %v1072 = vld [vmem:[#allocation8 + $0x40] sm:$0xff]
    %v1073 = vld [vmem:[#allocation8 + $0x48] sm:$0xff]
    %v1074 = vld [vmem:[#allocation8 + $0x50] sm:$0xff]
    %v1075 = vld [vmem:[#allocation8 + $0x58] sm:$0xff]
    %v1076 = vld [vmem:[#allocation8 + $0x60] sm:$0xff]
    %v1077 = vld [vmem:[#allocation8 + $0x68] sm:$0xff]
    %v1078 = vld [vmem:[#allocation8 + $0x70] sm:$0xff]
    %v1079 = vld [vmem:[#allocation8 + $0x78] sm:$0xff]
    %v1080 = vld [vmem:[%s6] sm:$0x1]
    %v1082 = vlaneseq
    %v1083 = vshrl.u32 %v1082, 7
    %v1084 = vsub.s32 0, %v1083
    %v1085 = vrot.slane %v1080, %v1084
    %1087 = vmatprep.subr.mxu0 0.0
    %1088 = vmatpush1.msra.mxu0 %v1064
    %1089 = vmatprep.subr.mxu0 0.0
    %1090 = vmatpush1.msra.mxu0 %v1065
    %1091 = vmatprep.subr.mxu0 0.0
    %1092 = vmatpush1.msra.mxu0 %v1066
    %1093 = vmatprep.subr.mxu0 0.0
    %1094 = vmatpush1.msra.mxu0 %v1067
    %1095 = vmatprep.subr.mxu0 0.0
    %1096 = vmatpush1.msra.mxu0 %v1068
    %1097 = vmatprep.subr.mxu0 0.0
    %1098 = vmatpush1.msra.mxu0 %v1069
    %1099 = vmatprep.subr.mxu0 0.0
    %1100 = vmatpush1.msra.mxu0 %v1070
    %1101 = vmatprep.subr.mxu0 0.0
    %1102 = vmatpush1.msra.mxu0 %v1071
    %1103 = vmatprep.subr.mxu0 0.0
    %1104 = vmatpush1.msra.mxu0 %v1072
    %1105 = vmatprep.subr.mxu0 0.0
    %1106 = vmatpush1.msra.mxu0 %v1073
    %1107 = vmatprep.subr.mxu0 0.0
    %1108 = vmatpush1.msra.mxu0 %v1074
    %1109 = vmatprep.subr.mxu0 0.0
    %1110 = vmatpush1.msra.mxu0 %v1075
    %1111 = vmatprep.subr.mxu0 0.0
    %1112 = vmatpush1.msra.mxu0 %v1076
    %1113 = vmatprep.subr.mxu0 0.0
    %1114 = vmatpush1.msra.mxu0 %v1077
    %1115 = vmatprep.subr.mxu0 0.0
    %1116 = vmatpush1.msra.mxu0 %v1078
    %1117 = vmatprep.subr.mxu0 0.0
    %1118 = vmatpush1.msra.mxu0 %v1079
    %1119 = vmatprep.subr.mxu0 0.0
    %1120 = vmatpush1.msra.mxu0 0.0
    %1121 = vmatprep.subr.mxu0 0.0
    %1122 = vmatpush1.msra.mxu0 0.0
    %1123 = vmatprep.subr.mxu0 0.0
    %1124 = vmatpush1.msra.mxu0 0.0
    %1125 = vmatprep.subr.mxu0 0.0
    %1126 = vmatpush1.msra.mxu0 0.0
    %1127 = vmatprep.subr.mxu0 0.0
    %1128 = vmatpush1.msra.mxu0 0.0
    %1129 = vmatprep.subr.mxu0 0.0
    %1130 = vmatpush1.msra.mxu0 0.0
    %1131 = vmatprep.subr.mxu0 0.0
    %1132 = vmatpush1.msra.mxu0 0.0
    %1133 = vmatprep.subr.mxu0 0.0
    %1134 = vmatpush1.msra.mxu0 0.0
    %1135 = vmatprep.subr.mxu0 0.0
    %1136 = vmatpush1.msra.mxu0 0.0
    %1137 = vmatprep.subr.mxu0 0.0
    %1138 = vmatpush1.msra.mxu0 0.0
    %1139 = vmatprep.subr.mxu0 0.0
    %1140 = vmatpush1.msra.mxu0 0.0
    %1141 = vmatprep.subr.mxu0 0.0
    %1142 = vmatpush1.msra.mxu0 0.0
    %1143 = vmatprep.subr.mxu0 0.0
    %1144 = vmatpush1.msra.mxu0 0.0
    %1145 = vmatprep.subr.mxu0 0.0
    %1146 = vmatpush1.msra.mxu0 0.0
    %1147 = vmatprep.subr.mxu0 0.0
    %1148 = vmatpush1.msra.mxu0 0.0
    %1149 = vmatprep.subr.mxu0 0.0
    %1150 = vmatpush1.msra.mxu0 0.0
    %1151 = vmatprep.mubr.f32.mxu0 0.0
    %1152 = vmatmul.mubr.f32.gmra.mrb[0].mxu0 %v1063
    %v1153 = vpop.f32.mrb[0].mxu0
    %v1154 = vadd.f32 %v1085, %v1153
    %v1155 = vpop.f32.mrb[0].mxu0
    %1156 = vdwg.mxu0
    %1157 = vst [vmem:[#allocation10] sm:$0xff] %v1154
    // Predicated region
    $region46: #{_forward_impl.1} parent=1 // pred_check
      _
    $region47: #{_forward_impl.1} parent=1 // pred_check_branch
      %1159 = sbr.rel (0) target = $region49
    $region48: #{_forward_impl.1} parent=1 // pred_region
      %s1161 = ssub.s32 128, 64
      %1162 = vsyncadd [#allocation4], %s1161
      %s1163 = sshll.u32 [#allocation10], 4
      %s1164 = int_to_ptr.vmem [resolvable:$true] %s1163
      %1169 = dma.vmem_to_hbm [thread:$0]  %s1164, 64, %s7, [#allocation4], 64, 64, 4
    $region49: #{_forward_impl.1} parent=1 // pred_fallthru
      _
    // Predicated region
    $region50: #{_forward_impl.1} parent=1 // pred_check
      _
    $region51: #{_forward_impl.1} parent=1 // pred_check_branch
      %1171 = sbr.rel (0) target = $region53
    $region52: #{_forward_impl.1} parent=1 // pred_region
      %1172 = dma.done [#allocation4], 128
    $region53: #{_forward_impl.1} parent=1 // pred_fallthru
      _
    %1173 = vsyncpa [#allocation3], 1
    %1174 = vsyncpa [#allocation6], 1
    %1175 = vsyncpa [#allocation9], 1
    %1176 = vsyncpa [#allocation4], 1

</llo_original>
